<compile_context>
chip_gen: v7x
topology: tpu7x:2x2x1
jax: 0.10.0
libtpu: 0.0.40
codegen_flags: <defaults>
</compile_context>

<pallas_src>
import jax
import jax.numpy as jnp
from jax.experimental import pallas as pl
from jax.experimental.pallas import tpu as pltpu


def _round_up(a, m):
    return -(-a // m) * m


def _lane_pack_target():
    """256-lane packing on v6e/v7x (2x256^2 MXU); 128 on v5e and older."""
    try:
        kind = jax.devices()[0].device_kind.lower()
    except Exception:
        return 128
    for old in ("v2", "v3", "v4", "v5"):
        if old in kind:
            return 128
    return 256


def nn_sc2_kernel(x_ref, scale_ref, w0_ref, b0_ref, wh_ref, bh_ref,
                  we_ref, be_ref, out_ref):
    # --- input scaling, shift pre-folded into W0: exp(alpha*(x-mean)/std) ---
    # TODO(synk): if a bundle dump shows the EUP slot binding, feed x
    # lane-dense (padded_rows//8, 8*P*n_input) and reshape after the exp.
    x = jnp.exp(x_ref[...] * scale_ref[...])

    cdt = w0_ref.dtype  # bf16 by default (f32 accumulate); f32 if requested

    # --- fcs: Linear + Tanh (block-diagonal lane-packed weights) ---
    h = jnp.tanh(jnp.dot(x.astype(cdt), w0_ref[...],
                         preferred_element_type=jnp.float32) + b0_ref[...])

    # --- fch: (n_layers-1) x [Linear + Tanh] ---
    for i in range(wh_ref.shape[0]):                   # static trip count
        h = jnp.tanh(jnp.dot(h.astype(cdt), wh_ref[i],
                             preferred_element_type=jnp.float32) + bh_ref[i])

    # --- fce: Linear ---
    # TODO(synk): if wall-minus-compute shows store tax on v5e, emit the last
    # layer transposed (lane axis = batch) so stores are unmasked.
    out_ref[...] = (jnp.dot(h.astype(cdt), we_ref[...],
                            preferred_element_type=jnp.float32) + be_ref[...])


def nn_sc2_forward(x, mean, std, alpha, params, *,
                   tile_rows=8192, compute_dtype=jnp.bfloat16):
    """x: (B, n_input) f32.  params: PyTorch-layout weights (out, in)."""
    B, n_input = x.shape
    n_hidden = params["w0"].shape[0]
    n_output = params["we"].shape[0]
    n_hidden_layers = params["wh"].shape[0]            # n_layers - 1

    # ---- lane-pack factor: P batch rows per vreg row (P*dim <= lane target) ----
    lane_target = _lane_pack_target()
    max_dim = max(n_input, n_hidden, n_output)
    P = max(1, lane_target // max_dim) if max_dim <= lane_target else 1
    # TODO(synk): on v5e, if a bundle dump shows the vmatmul slot binding even
    # with bf16 inputs, drop P for the hidden-layer matmuls (block-diag zeros
    # inflate MXU FLOPs by P).

    # ---- fold normalization constants ----
    alpha_s = alpha.reshape(())
    scale = (alpha_s / std).astype(jnp.float32)                   # (n_input,)
    shift = (-alpha_s * mean / std).astype(jnp.float32)           # (n_input,)
    scale_p = jnp.tile(scale, P).reshape(1, P * n_input)

    # exp(x*scale + shift) == exp(shift)*exp(x*scale); fold exp(shift_j) into
    # row j of W0^T (the first layer is linear in each input feature).
    w0_t = params["w0"].T * jnp.exp(shift)[:, None]               # (in, hid)

    # ---- block-diagonal (lane-packed) weights, transposed to (in, out) ----
    eye = jnp.eye(P, dtype=jnp.float32)
    w0_blk = jnp.kron(eye, w0_t)                                  # (P*in,  P*hid)
    b0_blk = jnp.tile(params["b0"], P).reshape(1, P * n_hidden)
    wh_blk = jnp.stack([jnp.kron(eye, params["wh"][i].T)
                        for i in range(n_hidden_layers)])         # (L-1, P*hid, P*hid)
    bh_blk = jnp.tile(params["bh"], (1, P)).reshape(n_hidden_layers, 1,
                                                    P * n_hidden)
    we_blk = jnp.kron(eye, params["we"].T)                        # (P*hid, P*out)
    be_blk = jnp.tile(params["be"], P).reshape(1, P * n_output)

    wbytes = 4
    if compute_dtype != jnp.float32:   # bf16 matmul inputs, f32 accumulate
        w0_blk = w0_blk.astype(compute_dtype)
        wh_blk = wh_blk.astype(compute_dtype)
        we_blk = we_blk.astype(compute_dtype)
        wbytes = 2

    # ---- pack & pad the batch ----
    rows = -(-B // P)
    pad_b = rows * P - B
    if pad_b:
        x = jnp.pad(x, ((0, pad_b), (0, 0)))
    x_packed = x.reshape(rows, P * n_input)

    # Big tiles amortize the ~0.35us/step pipeline overhead, but keep >= ~8
    # tiles for large batches so the "parallel" axis load-balances across the
    # two v7x TensorCores.  tr is always a multiple of 8.
    tile_rows = max(8, (tile_rows // 8) * 8)
    MIN_TILES = 8
    tr = min(tile_rows, _round_up(-(-rows // MIN_TILES), 8))
    tr = max(tr, 8)
    padded_rows = _round_up(rows, tr)
    if padded_rows != rows:
        x_packed = jnp.pad(x_packed, ((0, padded_rows - rows), (0, 0)))

    grid = (padded_rows // tr,)

    # Executed (block-diagonal, P-inflated) cost, not the dense math.
    pi, ph, po = P * n_input, P * n_hidden, P * n_output
    flops = 2 * padded_rows * (pi * ph + n_hidden_layers * ph * ph + ph * po)
    transc = padded_rows * (pi + (n_hidden_layers + 1) * ph)
    bytes_acc = (4 * padded_rows * (pi + po)
                 + wbytes * (pi * ph + n_hidden_layers * ph * ph + ph * po)
                 + 4 * (pi + (n_hidden_layers + 1) * ph + po))

    out_packed = pl.pallas_call(
        nn_sc2_kernel,
        out_shape=jax.ShapeDtypeStruct((padded_rows, po), jnp.float32),
        grid=grid,
        in_specs=[
            pl.BlockSpec((tr, pi), lambda i: (i, 0)),             # x tile
            pl.BlockSpec((1, pi), lambda i: (0, 0)),              # scale
            pl.BlockSpec((pi, ph), lambda i: (0, 0)),             # W0
            pl.BlockSpec((1, ph), lambda i: (0, 0)),              # b0
            pl.BlockSpec((n_hidden_layers, ph, ph),
                         lambda i: (0, 0, 0)),                    # Wh
            pl.BlockSpec((n_hidden_layers, 1, ph),
                         lambda i: (0, 0, 0)),                    # bh
            pl.BlockSpec((ph, po), lambda i: (0, 0)),             # We
            pl.BlockSpec((1, po), lambda i: (0, 0)),              # be
        ],
        out_specs=pl.BlockSpec((tr, po), lambda i: (i, 0)),
        compiler_params=pltpu.CompilerParams(
            dimension_semantics=("parallel",),
            vmem_limit_bytes=48 * 1024 * 1024,   # <= 64 MiB physical on v7x
        ),
        cost_estimate=pl.CostEstimate(
            flops=int(flops),
            transcendentals=int(transc),
            bytes_accessed=int(bytes_acc),
        ),
    )(x_packed, scale_p, w0_blk, b0_blk, wh_blk, bh_blk, we_blk, be_blk)

    return out_packed.reshape(padded_rows * P, n_output)[:B]


def nn_sc2_reference(x, mean, std, alpha, params):
    h = jnp.exp(alpha * (x - mean) / std)
    h = jnp.tanh(h @ params["w0"].T + params["b0"])
    for i in range(params["wh"].shape[0]):
        h = jnp.tanh(h @ params["wh"][i].T + params["bh"][i])
    return h @ params["we"].T + params["be"]


if __name__ == "__main__":
    # Small tabular-MLP shapes implied by the CSV forward.
    B, n_input, n_hidden, n_layers, n_output = 8, 4, 32, 3, 1

    key = jax.random.PRNGKey(0)
    keys = jax.random.split(key, 8)

    x = jax.random.normal(keys[0], (B, n_input), dtype=jnp.float32)
    mean = jax.random.normal(keys[1], (n_input,), dtype=jnp.float32) * 0.3
    std = jax.random.uniform(keys[2], (n_input,), dtype=jnp.float32,
                             minval=0.8, maxval=1.2)
    alpha = -jnp.ones((1,), dtype=jnp.float32)     # NN_SC2: Parameter(-1 * ones(1))

    params = {
        "w0": jax.random.normal(keys[3], (n_hidden, n_input), jnp.float32) * 0.2,
        "b0": jax.random.normal(keys[4], (n_hidden,), jnp.float32) * 0.1,
        "wh": jax.random.normal(keys[5], (n_layers - 1, n_hidden, n_hidden),
                                jnp.float32) * 0.2,
        "bh": jax.random.normal(keys[6], (n_layers - 1, n_hidden),
                                jnp.float32) * 0.1,
        "we": jax.random.normal(keys[7], (n_output, n_hidden), jnp.float32) * 0.2,
        "be": jnp.zeros((n_output,), dtype=jnp.float32),
    }

    ref = nn_sc2_reference(x, mean, std, alpha, params)

    # f32 matmul path: tight check against the f32 reference.
    out_f32 = nn_sc2_forward(x, mean, std, alpha, params,
                             compute_dtype=jnp.float32)
    out_f32 = jax.block_until_ready(out_f32)
    assert out_f32.shape == (B, n_output)
    assert jnp.allclose(out_f32, ref, atol=1e-4, rtol=1e-4), \
        "f32 kernel mismatch vs reference"

    # Default perf path: bf16 matmul inputs, f32 accumulate (looser tolerance).
    out = nn_sc2_forward(x, mean, std, alpha, params)
    out = jax.block_until_ready(out)
    assert out.shape == (B, n_output)
    assert jnp.allclose(out, ref, atol=5e-2, rtol=5e-2), \
        "bf16 kernel mismatch vs reference"

    print("KERNEL_OK")
</pallas_src>

<mosaic_0001>
module attributes {stable_mosaic.version = 11 : i64} {
  func.func @nn_sc2_kernel(%arg0: i32, %arg1: memref<8x32xf32, #tpu.memory_space<vmem>>, %arg2: memref<1x32xf32, #tpu.memory_space<vmem>>, %arg3: memref<32x256xf32, #tpu.memory_space<vmem>>, %arg4: memref<1x256xf32, #tpu.memory_space<vmem>>, %arg5: memref<2x256x256xf32, #tpu.memory_space<vmem>>, %arg6: memref<2x1x256xf32, #tpu.memory_space<vmem>>, %arg7: memref<256x8xf32, #tpu.memory_space<vmem>>, %arg8: memref<1x8xf32, #tpu.memory_space<vmem>>, %arg9: memref<8x8xf32, #tpu.memory_space<vmem>>) attributes {dimension_semantics = [#tpu.dimension_semantics<parallel>], iteration_bounds = array<i64: 1>, scalar_prefetch = 0 : i64, scratch_operands = 0 : i64, tpu.core_type = #tpu.core_type<tc>, window_params = [{transform_indices = @transform_0, window_bounds = array<i64: 8, 32>}, {pipeline_mode = #tpu.pipeline_mode<synchronous>, transform_indices = @transform_1, window_bounds = array<i64: 1, 32>}, {pipeline_mode = #tpu.pipeline_mode<synchronous>, transform_indices = @transform_2, window_bounds = array<i64: 32, 256>}, {pipeline_mode = #tpu.pipeline_mode<synchronous>, transform_indices = @transform_3, window_bounds = array<i64: 1, 256>}, {pipeline_mode = #tpu.pipeline_mode<synchronous>, transform_indices = @transform_4, window_bounds = array<i64: 2, 256, 256>}, {pipeline_mode = #tpu.pipeline_mode<synchronous>, transform_indices = @transform_5, window_bounds = array<i64: 2, 1, 256>}, {pipeline_mode = #tpu.pipeline_mode<synchronous>, transform_indices = @transform_6, window_bounds = array<i64: 256, 8>}, {pipeline_mode = #tpu.pipeline_mode<synchronous>, transform_indices = @transform_7, window_bounds = array<i64: 1, 8>}, {transform_indices = @transform_8, window_bounds = array<i64: 8, 8>}]} {
    %c0 = arith.constant 0 : index
    %c0_0 = arith.constant 0 : index
    %0 = vector.load %arg1[%c0, %c0_0] : memref<8x32xf32, #tpu.memory_space<vmem>>, vector<8x32xf32>
    %c0_1 = arith.constant 0 : index
    %c0_2 = arith.constant 0 : index
    %1 = vector.load %arg2[%c0_1, %c0_2] : memref<1x32xf32, #tpu.memory_space<vmem>>, vector<1x32xf32>
    %2 = vector.broadcast %1 : vector<1x32xf32> to vector<8x32xf32>
    %3 = arith.mulf %0, %2 : vector<8x32xf32>
    %4 = math.exp %3 : vector<8x32xf32>
    %c0_3 = arith.constant 0 : index
    %c0_4 = arith.constant 0 : index
    %5 = vector.load %arg3[%c0_3, %c0_4] : memref<32x256xf32, #tpu.memory_space<vmem>>, vector<32x256xf32>
    %cst = arith.constant dense<0.000000e+00> : vector<8x256xf32>
    %6 = tpu.matmul %4, %5, %cst {dimension_numbers = #tpu.dot_dimension_numbers<[1], [0], [0], [1], [0, 0, 1, 1], [], []>} : vector<8x32xf32>, vector<32x256xf32>, vector<8x256xf32> -> vector<8x256xf32>
    %c0_5 = arith.constant 0 : index
    %c0_6 = arith.constant 0 : index
    %7 = vector.load %arg4[%c0_5, %c0_6] : memref<1x256xf32, #tpu.memory_space<vmem>>, vector<1x256xf32>
    %8 = vector.broadcast %7 : vector<1x256xf32> to vector<8x256xf32>
    %9 = arith.addf %6, %8 : vector<8x256xf32>
    %10 = math.tanh %9 : vector<8x256xf32>
    %c0_7 = arith.constant 0 : index
    %c0_8 = arith.constant 0 : index
    %c0_9 = arith.constant 0 : index
    %11 = vector.load %arg5[%c0_7, %c0_8, %c0_9] : memref<2x256x256xf32, #tpu.memory_space<vmem>>, vector<1x256x256xf32>
    %12 = vector.shape_cast %11 : vector<1x256x256xf32> to vector<256x256xf32>
    %cst_10 = arith.constant dense<0.000000e+00> : vector<8x256xf32>
    %13 = tpu.matmul %10, %12, %cst_10 {dimension_numbers = #tpu.dot_dimension_numbers<[1], [0], [0], [1], [0, 0, 1, 1], [], []>} : vector<8x256xf32>, vector<256x256xf32>, vector<8x256xf32> -> vector<8x256xf32>
    %c0_11 = arith.constant 0 : index
    %c0_12 = arith.constant 0 : index
    %c0_13 = arith.constant 0 : index
    %14 = vector.load %arg6[%c0_11, %c0_12, %c0_13] : memref<2x1x256xf32, #tpu.memory_space<vmem>>, vector<1x1x256xf32>
    %15 = vector.shape_cast %14 : vector<1x1x256xf32> to vector<1x256xf32>
    %16 = vector.broadcast %15 : vector<1x256xf32> to vector<8x256xf32>
    %17 = arith.addf %13, %16 : vector<8x256xf32>
    %18 = math.tanh %17 : vector<8x256xf32>
    %c1 = arith.constant 1 : index
    %c0_14 = arith.constant 0 : index
    %c0_15 = arith.constant 0 : index
    %19 = vector.load %arg5[%c1, %c0_14, %c0_15] : memref<2x256x256xf32, #tpu.memory_space<vmem>>, vector<1x256x256xf32>
    %20 = vector.shape_cast %19 : vector<1x256x256xf32> to vector<256x256xf32>
    %cst_16 = arith.constant dense<0.000000e+00> : vector<8x256xf32>
    %21 = tpu.matmul %18, %20, %cst_16 {dimension_numbers = #tpu.dot_dimension_numbers<[1], [0], [0], [1], [0, 0, 1, 1], [], []>} : vector<8x256xf32>, vector<256x256xf32>, vector<8x256xf32> -> vector<8x256xf32>
    %c1_17 = arith.constant 1 : index
    %c0_18 = arith.constant 0 : index
    %c0_19 = arith.constant 0 : index
    %22 = vector.load %arg6[%c1_17, %c0_18, %c0_19] : memref<2x1x256xf32, #tpu.memory_space<vmem>>, vector<1x1x256xf32>
    %23 = vector.shape_cast %22 : vector<1x1x256xf32> to vector<1x256xf32>
    %24 = vector.broadcast %23 : vector<1x256xf32> to vector<8x256xf32>
    %25 = arith.addf %21, %24 : vector<8x256xf32>
    %26 = math.tanh %25 : vector<8x256xf32>
    %c0_20 = arith.constant 0 : index
    %c0_21 = arith.constant 0 : index
    %27 = vector.load %arg7[%c0_20, %c0_21] : memref<256x8xf32, #tpu.memory_space<vmem>>, vector<256x8xf32>
    %cst_22 = arith.constant dense<0.000000e+00> : vector<8x8xf32>
    %28 = tpu.matmul %26, %27, %cst_22 {dimension_numbers = #tpu.dot_dimension_numbers<[1], [0], [0], [1], [0, 0, 1, 1], [], []>} : vector<8x256xf32>, vector<256x8xf32>, vector<8x8xf32> -> vector<8x8xf32>
    %c0_23 = arith.constant 0 : index
    %c0_24 = arith.constant 0 : index
    %29 = vector.load %arg8[%c0_23, %c0_24] : memref<1x8xf32, #tpu.memory_space<vmem>>, vector<1x8xf32>
    %30 = vector.broadcast %29 : vector<1x8xf32> to vector<8x8xf32>
    %31 = arith.addf %28, %30 : vector<8x8xf32>
    %c0_25 = arith.constant 0 : index
    %c0_26 = arith.constant 0 : index
    %32 = vector.load %arg9[%c0_25, %c0_26] : memref<8x8xf32, #tpu.memory_space<vmem>>, vector<8x8xf32>
    tpu.vector_store %arg9[%c0_25, %c0_26], %31 {strides = array<i32>} : memref<8x8xf32, #tpu.memory_space<vmem>>, vector<8x8xf32>,
    return
  }
  func.func @transform_0(%arg0: i32) -> (i32, i32) {
    %c0_i32 = arith.constant 0 : i32
    %c0_i32_0 = arith.constant 0 : i32
    return %arg0, %c0_i32 : i32, i32
  }
  func.func @transform_1(%arg0: i32) -> (i32, i32) {
    %c0_i32 = arith.constant 0 : i32
    %c0_i32_0 = arith.constant 0 : i32
    %c0_i32_1 = arith.constant 0 : i32
    return %c0_i32, %c0_i32_0 : i32, i32
  }
  func.func @transform_2(%arg0: i32) -> (i32, i32) {
    %c0_i32 = arith.constant 0 : i32
    %c0_i32_0 = arith.constant 0 : i32
    %c0_i32_1 = arith.constant 0 : i32
    return %c0_i32, %c0_i32_0 : i32, i32
  }
  func.func @transform_3(%arg0: i32) -> (i32, i32) {
    %c0_i32 = arith.constant 0 : i32
    %c0_i32_0 = arith.constant 0 : i32
    %c0_i32_1 = arith.constant 0 : i32
    return %c0_i32, %c0_i32_0 : i32, i32
  }
  func.func @transform_4(%arg0: i32) -> (i32, i32, i32) {
    %c0_i32 = arith.constant 0 : i32
    %c0_i32_0 = arith.constant 0 : i32
    %c0_i32_1 = arith.constant 0 : i32
    %c0_i32_2 = arith.constant 0 : i32
    return %c0_i32, %c0_i32_0, %c0_i32_1 : i32, i32, i32
  }
  func.func @transform_5(%arg0: i32) -> (i32, i32, i32) {
    %c0_i32 = arith.constant 0 : i32
    %c0_i32_0 = arith.constant 0 : i32
    %c0_i32_1 = arith.constant 0 : i32
    %c0_i32_2 = arith.constant 0 : i32
    return %c0_i32, %c0_i32_0, %c0_i32_1 : i32, i32, i32
  }
  func.func @transform_6(%arg0: i32) -> (i32, i32) {
    %c0_i32 = arith.constant 0 : i32
    %c0_i32_0 = arith.constant 0 : i32
    %c0_i32_1 = arith.constant 0 : i32
    return %c0_i32, %c0_i32_0 : i32, i32
  }
  func.func @transform_7(%arg0: i32) -> (i32, i32) {
    %c0_i32 = arith.constant 0 : i32
    %c0_i32_0 = arith.constant 0 : i32
    %c0_i32_1 = arith.constant 0 : i32
    return %c0_i32, %c0_i32_0 : i32, i32
  }
  func.func @transform_8(%arg0: i32) -> (i32, i32) {
    %c0_i32 = arith.constant 0 : i32
    %c0_i32_0 = arith.constant 0 : i32
    return %arg0, %c0_i32 : i32, i32
  }
}

</mosaic_0001>

<llo_original>
// kernel: tpu_custom_call.1
$region0: #{tpu_custom_call.1}
  #allocation0 [shape = 'u32[]', space=smem, size = 0x4, offset = 0x4, fixed_abs, tag = 'smem constant byte address 0x4 - core index']
  #allocation1 [shape = 'u32[144,128]{1,0:T(1,128)}', space=vmem, size = 0x12000, scoped, tag = 'internal scratch']
  %s0 = inlined_call_operand.vmem [shape: f32[8,32], index: 0, kind: input, shape index: {}]
  %s1 = inlined_call_operand.vmem [shape: f32[1,32], index: 1, kind: input, shape index: {}]
  %s2 = inlined_call_operand.vmem [shape: f32[32,256], index: 2, kind: input, shape index: {}]
  %s3 = inlined_call_operand.vmem [shape: f32[1,256], index: 3, kind: input, shape index: {}]
  %s4 = inlined_call_operand.hbm [shape: f32[2,256,256], index: 4, kind: input, shape index: {}]
  %s5 = inlined_call_operand.vmem [shape: f32[2,1,256], index: 5, kind: input, shape index: {}]
  %s6 = inlined_call_operand.vmem [shape: f32[256,8], index: 6, kind: input, shape index: {}]
  %s7 = inlined_call_operand.vmem [shape: f32[1,8], index: 7, kind: input, shape index: {}]
  %s8 = inlined_call_operand.hbm [shape: f32[8,8], index: 8, kind: output, shape index: {}]
  %s9 = sld [smem:[#allocation0]]
  $region46: #{tpu_custom_call.1} parent=0
    _
  %s11 = ssub.s32 1, %s9
  %s12 = scalar_select 0, %s11, %s9
  $region1: #{tpu_custom_call.1} parent=0
    #allocation2 [shape = 'u8[524288]{0}', space=vmem, size = 0x80000, scoped, tag = 'input window, operand 4, single buffered']
    #allocation3 [shape = 's32[1]{0}', space=sflag, size = 0x4, scoped, tag = 'scoped memory for tpu_custom_call.1']
    #allocation4 [shape = 's32[1]{0}', space=sflag, size = 0x4, scoped, tag = 'scoped memory for tpu_custom_call.1']
    #allocation5 [shape = 'u8[4096]{0}', space=vmem, size = 0x1000, scoped, tag = 'output window, operand 0, single buffered']
    %13 = vsyncpa [#allocation3], 0
    %14 = vsyncpa [#allocation4], 0
    // Predicated region
    $region2: #{tpu_custom_call.1} parent=1 // pred_check
      _
    $region3: #{tpu_custom_call.1} parent=1 // pred_check_branch
      %16 = sbr.rel (0) target = $region5
    $region4: #{tpu_custom_call.1} parent=1 // pred_region
      _
    $region5: #{tpu_custom_call.1} parent=1 // pred_fallthru
      _
    // Predicated region
    $region6: #{tpu_custom_call.1} parent=1 // pred_check
      _
    $region7: #{tpu_custom_call.1} parent=1 // pred_check_branch
      %18 = sbr.rel (0) target = $region9
    $region8: #{tpu_custom_call.1} parent=1 // pred_region
      _
    $region9: #{tpu_custom_call.1} parent=1 // pred_fallthru
      _
    // Predicated region
    $region10: #{tpu_custom_call.1} parent=1 // pred_check
      _
    $region11: #{tpu_custom_call.1} parent=1 // pred_check_branch
      %20 = sbr.rel (0) target = $region13
    $region12: #{tpu_custom_call.1} parent=1 // pred_region
      _
    $region13: #{tpu_custom_call.1} parent=1 // pred_fallthru
      _
    // Predicated region
    $region14: #{tpu_custom_call.1} parent=1 // pred_check
      _
    $region15: #{tpu_custom_call.1} parent=1 // pred_check_branch
      %22 = sbr.rel (0) target = $region17
    $region16: #{tpu_custom_call.1} parent=1 // pred_region
      _
    $region17: #{tpu_custom_call.1} parent=1 // pred_fallthru
      _
    // Predicated region
    $region18: #{tpu_custom_call.1} parent=1 // pred_check
      _
    $region19: #{tpu_custom_call.1} parent=1 // pred_check_branch
      %24 = sbr.rel (0) target = $region21
    $region20: #{tpu_custom_call.1} parent=1 // pred_region
      %s26 = ssub.s32 16384, 16384
      %27 = vsyncadd [#allocation3], %s26
      %s28 = sshll.u32 [#allocation2], 4
      %s29 = int_to_ptr.vmem [resolvable:$true] %s28
      %34 = dma.hbm_to_vmem [thread:$0]  %s4, 16384, %s29, [#allocation3], 256, 256, 16
    $region21: #{tpu_custom_call.1} parent=1 // pred_fallthru
      _
    // Predicated region
    $region22: #{tpu_custom_call.1} parent=1 // pred_check
      _
    $region23: #{tpu_custom_call.1} parent=1 // pred_check_branch
      %36 = sbr.rel (0) target = $region25
    $region24: #{tpu_custom_call.1} parent=1 // pred_region
      _
    $region25: #{tpu_custom_call.1} parent=1 // pred_fallthru
      _
    // Predicated region
    $region26: #{tpu_custom_call.1} parent=1 // pred_check
      _
    $region27: #{tpu_custom_call.1} parent=1 // pred_check_branch
      %38 = sbr.rel (0) target = $region29
    $region28: #{tpu_custom_call.1} parent=1 // pred_region
      _
    $region29: #{tpu_custom_call.1} parent=1 // pred_fallthru
      _
    // Predicated region
    $region30: #{tpu_custom_call.1} parent=1 // pred_check
      _
    $region31: #{tpu_custom_call.1} parent=1 // pred_check_branch
      %40 = sbr.rel (0) target = $region33
    $region32: #{tpu_custom_call.1} parent=1 // pred_region
      _
    $region33: #{tpu_custom_call.1} parent=1 // pred_fallthru
      _
    // Predicated region
    $region34: #{tpu_custom_call.1} parent=1 // pred_check
      _
    $region35: #{tpu_custom_call.1} parent=1 // pred_check_branch
      %42 = sbr.rel (0) target = $region37
    $region36: #{tpu_custom_call.1} parent=1 // pred_region
      %43 = dma.done [#allocation3], 16384
    $region37: #{tpu_custom_call.1} parent=1 // pred_fallthru
      _
    %v44 = vld [vmem:[%s0] sm:$0xff]
    %v45 = vld [vmem:[%s1] sm:$0x1]
    %v47 = vlaneseq
    %v48 = vshrl.u32 %v47, 7
    %v49 = vsub.s32 0, %v48
    %v50 = vrot.slane %v45, %v49
    %v52 = vmul.f32 %v44, %v50
    %v53 = vmul.f32 %v52, 1.442695
    %v54 = vpow.pop %v53
    %v55 = vld [vmem:[%s2] sm:$0xff]
    %v56 = vld [vmem:[%s2 + $0x8] sm:$0xff]
    %v57 = vld [vmem:[%s2 + $0x10] sm:$0xff]
    %v58 = vld [vmem:[%s2 + $0x18] sm:$0xff]
    %v59 = vld [vmem:[%s2 + $0x20] sm:$0xff]
    %v60 = vld [vmem:[%s2 + $0x28] sm:$0xff]
    %v61 = vld [vmem:[%s2 + $0x30] sm:$0xff]
    %v62 = vld [vmem:[%s2 + $0x38] sm:$0xff]
    %v63 = vld [vmem:[%s3] sm:$0x3]
    %v65 = vlaneseq
    %v66 = vshrl.u32 %v65, 7
    %v67 = vsub.s32 0, %v66
    %v68 = vrot.slane %v63, %v67
    %v69 = vlaneseq
    %v70 = vshrl.u32 %v69, 7
    %v71 = vsub.s32 1, %v70
    %v72 = vrot.slane %v63, %v71
    %vm75 = vcmask 261120
    %v77 = vsel %vm75, %v54, 0
    %79 = vmatprep.subr.mxu0 %v56
    %80 = vmatpush1.msra.mxu0 %v55
    %81 = vmatprep.subr.mxu0 %v58
    %82 = vmatpush1.msra.mxu0 %v57
    %83 = vmatprep.subr.mxu0 %v60
    %84 = vmatpush1.msra.mxu0 %v59
    %85 = vmatprep.subr.mxu0 %v62
    %86 = vmatpush1.msra.mxu0 %v61
    %87 = vmatprep.subr.mxu0 0.0
    %88 = vmatpush1.msra.mxu0 0.0
    %89 = vmatprep.subr.mxu0 0.0
    %90 = vmatpush1.msra.mxu0 0.0
    %91 = vmatprep.subr.mxu0 0.0
    %92 = vmatpush1.msra.mxu0 0.0
    %93 = vmatprep.subr.mxu0 0.0
    %94 = vmatpush1.msra.mxu0 0.0
    %95 = vmatprep.subr.mxu0 0.0
    %96 = vmatpush1.msra.mxu0 0.0
    %97 = vmatprep.subr.mxu0 0.0
    %98 = vmatpush1.msra.mxu0 0.0
    %99 = vmatprep.subr.mxu0 0.0
    %100 = vmatpush1.msra.mxu0 0.0
    %101 = vmatprep.subr.mxu0 0.0
    %102 = vmatpush1.msra.mxu0 0.0
    %103 = vmatprep.subr.mxu0 0.0
    %104 = vmatpush1.msra.mxu0 0.0
    %105 = vmatprep.subr.mxu0 0.0
    %106 = vmatpush1.msra.mxu0 0.0
    %107 = vmatprep.subr.mxu0 0.0
    %108 = vmatpush1.msra.mxu0 0.0
    %109 = vmatprep.subr.mxu0 0.0
    %110 = vmatpush1.msra.mxu0 0.0
    %111 = vmatprep.subr.mxu0 0.0
    %112 = vmatpush1.msra.mxu0 0.0
    %113 = vmatprep.subr.mxu0 0.0
    %114 = vmatpush1.msra.mxu0 0.0
    %115 = vmatprep.subr.mxu0 0.0
    %116 = vmatpush1.msra.mxu0 0.0
    %117 = vmatprep.subr.mxu0 0.0
    %118 = vmatpush1.msra.mxu0 0.0
    %119 = vmatprep.subr.mxu0 0.0
    %120 = vmatpush1.msra.mxu0 0.0
    %121 = vmatprep.subr.mxu0 0.0
    %122 = vmatpush1.msra.mxu0 0.0
    %123 = vmatprep.subr.mxu0 0.0
    %124 = vmatpush1.msra.mxu0 0.0
    %125 = vmatprep.subr.mxu0 0.0
    %126 = vmatpush1.msra.mxu0 0.0
    %127 = vmatprep.subr.mxu0 0.0
    %128 = vmatpush1.msra.mxu0 0.0
    %129 = vmatprep.subr.mxu0 0.0
    %130 = vmatpush1.msra.mxu0 0.0
    %131 = vmatprep.subr.mxu0 0.0
    %132 = vmatpush1.msra.mxu0 0.0
    %133 = vmatprep.subr.mxu0 0.0
    %134 = vmatpush1.msra.mxu0 0.0
    %135 = vmatprep.subr.mxu0 0.0
    %136 = vmatpush1.msra.mxu0 0.0
    %137 = vmatprep.subr.mxu0 0.0
    %138 = vmatpush1.msra.mxu0 0.0
    %139 = vmatprep.subr.mxu0 0.0
    %140 = vmatpush1.msra.mxu0 0.0
    %141 = vmatprep.subr.mxu0 0.0
    %142 = vmatpush1.msra.mxu0 0.0
    %143 = vmatprep.mubr.f32.mxu0 0.0
    %144 = vmatmul.mubr.f32.gmra.mrb[0].mxu0 %v77
    %v145 = vpop.f32.mrb[0].mxu0
    %v146 = vadd.f32 %v68, %v145
    %v147 = vpop.f32.mrb[0].mxu0
    %v148 = vadd.f32 %v72, %v147
    %149 = vdwg.mxu0
    %v150 = vtanh.pop %v146
    %v151 = vtanh.pop %v148
    %v152 = vld [vmem:[#allocation2] sm:$0xff]
    %v153 = vld [vmem:[#allocation2 + $0x8] sm:$0xff]
    %v154 = vld [vmem:[#allocation2 + $0x10] sm:$0xff]
    %v155 = vld [vmem:[#allocation2 + $0x18] sm:$0xff]
    %v156 = vld [vmem:[#allocation2 + $0x20] sm:$0xff]
    %v157 = vld [vmem:[#allocation2 + $0x28] sm:$0xff]
    %v158 = vld [vmem:[#allocation2 + $0x30] sm:$0xff]
    %v159 = vld [vmem:[#allocation2 + $0x38] sm:$0xff]
    %v160 = vld [vmem:[#allocation2 + $0x40] sm:$0xff]
    %v161 = vld [vmem:[#allocation2 + $0x48] sm:$0xff]
    %v162 = vld [vmem:[#allocation2 + $0x50] sm:$0xff]
    %v163 = vld [vmem:[#allocation2 + $0x58] sm:$0xff]
    %v164 = vld [vmem:[#allocation2 + $0x60] sm:$0xff]
    %v165 = vld [vmem:[#allocation2 + $0x68] sm:$0xff]
    %v166 = vld [vmem:[#allocation2 + $0x70] sm:$0xff]
    %v167 = vld [vmem:[#allocation2 + $0x78] sm:$0xff]
    %v168 = vld [vmem:[#allocation2 + $0x80] sm:$0xff]
    %v169 = vld [vmem:[#allocation2 + $0x88] sm:$0xff]
    %v170 = vld [vmem:[#allocation2 + $0x90] sm:$0xff]
    %v171 = vld [vmem:[#allocation2 + $0x98] sm:$0xff]
    %v172 = vld [vmem:[#allocation2 + $0xa0] sm:$0xff]
    %v173 = vld [vmem:[#allocation2 + $0xa8] sm:$0xff]
    %v174 = vld [vmem:[#allocation2 + $0xb0] sm:$0xff]
    %v175 = vld [vmem:[#allocation2 + $0xb8] sm:$0xff]
    %v176 = vld [vmem:[#allocation2 + $0xc0] sm:$0xff]
    %v177 = vld [vmem:[#allocation2 + $0xc8] sm:$0xff]
    %v178 = vld [vmem:[#allocation2 + $0xd0] sm:$0xff]
    %v179 = vld [vmem:[#allocation2 + $0xd8] sm:$0xff]
    %v180 = vld [vmem:[#allocation2 + $0xe0] sm:$0xff]
    %v181 = vld [vmem:[#allocation2 + $0xe8] sm:$0xff]
    %v182 = vld [vmem:[#allocation2 + $0xf0] sm:$0xff]
    %v183 = vld [vmem:[#allocation2 + $0xf8] sm:$0xff]
    %v184 = vld [vmem:[#allocation2 + $0x100] sm:$0xff]
    %v185 = vld [vmem:[#allocation2 + $0x108] sm:$0xff]
    %v186 = vld [vmem:[#allocation2 + $0x110] sm:$0xff]
    %v187 = vld [vmem:[#allocation2 + $0x118] sm:$0xff]
    %v188 = vld [vmem:[#allocation2 + $0x120] sm:$0xff]
    %v189 = vld [vmem:[#allocation2 + $0x128] sm:$0xff]
    %v190 = vld [vmem:[#allocation2 + $0x130] sm:$0xff]
    %v191 = vld [vmem:[#allocation2 + $0x138] sm:$0xff]
    %v192 = vld [vmem:[#allocation2 + $0x140] sm:$0xff]
    %v193 = vld [vmem:[#allocation2 + $0x148] sm:$0xff]
    %v194 = vld [vmem:[#allocation2 + $0x150] sm:$0xff]
    %v195 = vld [vmem:[#allocation2 + $0x158] sm:$0xff]
    %v196 = vld [vmem:[#allocation2 + $0x160] sm:$0xff]
    %v197 = vld [vmem:[#allocation2 + $0x168] sm:$0xff]
    %v198 = vld [vmem:[#allocation2 + $0x170] sm:$0xff]
    %v199 = vld [vmem:[#allocation2 + $0x178] sm:$0xff]
    %v200 = vld [vmem:[#allocation2 + $0x180] sm:$0xff]
    %v201 = vld [vmem:[#allocation2 + $0x188] sm:$0xff]
    %v202 = vld [vmem:[#allocation2 + $0x190] sm:$0xff]
    %v203 = vld [vmem:[#allocation2 + $0x198] sm:$0xff]
    %v204 = vld [vmem:[#allocation2 + $0x1a0] sm:$0xff]
    %v205 = vld [vmem:[#allocation2 + $0x1a8] sm:$0xff]
    %v206 = vld [vmem:[#allocation2 + $0x1b0] sm:$0xff]
    %v207 = vld [vmem:[#allocation2 + $0x1b8] sm:$0xff]
    %v208 = vld [vmem:[#allocation2 + $0x1c0] sm:$0xff]
    %v209 = vld [vmem:[#allocation2 + $0x1c8] sm:$0xff]
    %v210 = vld [vmem:[#allocation2 + $0x1d0] sm:$0xff]
    %v211 = vld [vmem:[#allocation2 + $0x1d8] sm:$0xff]
    %v212 = vld [vmem:[#allocation2 + $0x1e0] sm:$0xff]
    %v213 = vld [vmem:[#allocation2 + $0x1e8] sm:$0xff]
    %v214 = vld [vmem:[#allocation2 + $0x1f0] sm:$0xff]
    %v215 = vld [vmem:[#allocation2 + $0x1f8] sm:$0xff]
    %v216 = vld [vmem:[%s5] sm:$0x3]
    %v218 = vlaneseq
    %v219 = vshrl.u32 %v218, 7
    %v220 = vsub.s32 0, %v219
    %v221 = vrot.slane %v216, %v220
    %v222 = vlaneseq
    %v223 = vshrl.u32 %v222, 7
    %v224 = vsub.s32 1, %v223
    %v225 = vrot.slane %v216, %v224
    %228 = vmatprep.subr.mxu0 %v153
    %229 = vmatpush1.msra.mxu0 %v152
    %230 = vmatprep.subr.mxu0 %v155
    %231 = vmatpush1.msra.mxu0 %v154
    %232 = vmatprep.subr.mxu0 %v157
    %233 = vmatpush1.msra.mxu0 %v156
    %234 = vmatprep.subr.mxu0 %v159
    %235 = vmatpush1.msra.mxu0 %v158
    %236 = vmatprep.subr.mxu0 %v161
    %237 = vmatpush1.msra.mxu0 %v160
    %238 = vmatprep.subr.mxu0 %v163
    %239 = vmatpush1.msra.mxu0 %v162
    %240 = vmatprep.subr.mxu0 %v165
    %241 = vmatpush1.msra.mxu0 %v164
    %242 = vmatprep.subr.mxu0 %v167
    %243 = vmatpush1.msra.mxu0 %v166
    %244 = vmatprep.subr.mxu0 %v169
    %245 = vmatpush1.msra.mxu0 %v168
    %246 = vmatprep.subr.mxu0 %v171
    %247 = vmatpush1.msra.mxu0 %v170
    %248 = vmatprep.subr.mxu0 %v173
    %249 = vmatpush1.msra.mxu0 %v172
    %250 = vmatprep.subr.mxu0 %v175
    %251 = vmatpush1.msra.mxu0 %v174
    %252 = vmatprep.subr.mxu0 %v177
    %253 = vmatpush1.msra.mxu0 %v176
    %254 = vmatprep.subr.mxu0 %v179
    %255 = vmatpush1.msra.mxu0 %v178
    %256 = vmatprep.subr.mxu0 %v181
    %257 = vmatpush1.msra.mxu0 %v180
    %258 = vmatprep.subr.mxu0 %v183
    %259 = vmatpush1.msra.mxu0 %v182
    %260 = vmatprep.subr.mxu0 %v185
    %261 = vmatpush1.msra.mxu0 %v184
    %262 = vmatprep.subr.mxu0 %v187
    %263 = vmatpush1.msra.mxu0 %v186
    %264 = vmatprep.subr.mxu0 %v189
    %265 = vmatpush1.msra.mxu0 %v188
    %266 = vmatprep.subr.mxu0 %v191
    %267 = vmatpush1.msra.mxu0 %v190
    %268 = vmatprep.subr.mxu0 %v193
    %269 = vmatpush1.msra.mxu0 %v192
    %270 = vmatprep.subr.mxu0 %v195
    %271 = vmatpush1.msra.mxu0 %v194
    %272 = vmatprep.subr.mxu0 %v197
    %273 = vmatpush1.msra.mxu0 %v196
    %274 = vmatprep.subr.mxu0 %v199
    %275 = vmatpush1.msra.mxu0 %v198
    %276 = vmatprep.subr.mxu0 %v201
    %277 = vmatpush1.msra.mxu0 %v200
    %278 = vmatprep.subr.mxu0 %v203
    %279 = vmatpush1.msra.mxu0 %v202
    %280 = vmatprep.subr.mxu0 %v205
    %281 = vmatpush1.msra.mxu0 %v204
    %282 = vmatprep.subr.mxu0 %v207
    %283 = vmatpush1.msra.mxu0 %v206
    %284 = vmatprep.subr.mxu0 %v209
    %285 = vmatpush1.msra.mxu0 %v208
    %286 = vmatprep.subr.mxu0 %v211
    %287 = vmatpush1.msra.mxu0 %v210
    %288 = vmatprep.subr.mxu0 %v213
    %289 = vmatpush1.msra.mxu0 %v212
    %290 = vmatprep.subr.mxu0 %v215
    %291 = vmatpush1.msra.mxu0 %v214
    %292 = vmatprep.mubr.f32.mxu0 %v151
    %293 = vmatmul.mubr.f32.gmra.mrb[0].mxu0 %v150
    %v294 = vpop.f32.mrb[0].mxu0
    %v295 = vadd.f32 %v221, %v294
    %v296 = vpop.f32.mrb[0].mxu0
    %v297 = vadd.f32 %v225, %v296
    %298 = vdwg.mxu0
    %v299 = vtanh.pop %v295
    %v300 = vtanh.pop %v297
    %s301 = scalar_lea.vmem [#allocation2], 512
    %v302 = vld [vmem:[%s301] sm:$0xff]
    %v303 = vld [vmem:[%s301 + $0x8] sm:$0xff]
    %v304 = vld [vmem:[%s301 + $0x10] sm:$0xff]
    %v305 = vld [vmem:[%s301 + $0x18] sm:$0xff]
    %v306 = vld [vmem:[%s301 + $0x20] sm:$0xff]
    %v307 = vld [vmem:[%s301 + $0x28] sm:$0xff]
    %v308 = vld [vmem:[%s301 + $0x30] sm:$0xff]
    %v309 = vld [vmem:[%s301 + $0x38] sm:$0xff]
    %v310 = vld [vmem:[%s301 + $0x40] sm:$0xff]
    %v311 = vld [vmem:[%s301 + $0x48] sm:$0xff]
    %v312 = vld [vmem:[%s301 + $0x50] sm:$0xff]
    %v313 = vld [vmem:[%s301 + $0x58] sm:$0xff]
    %v314 = vld [vmem:[%s301 + $0x60] sm:$0xff]
    %v315 = vld [vmem:[%s301 + $0x68] sm:$0xff]
    %v316 = vld [vmem:[%s301 + $0x70] sm:$0xff]
    %v317 = vld [vmem:[%s301 + $0x78] sm:$0xff]
    %v318 = vld [vmem:[%s301 + $0x80] sm:$0xff]
    %v319 = vld [vmem:[%s301 + $0x88] sm:$0xff]
    %v320 = vld [vmem:[%s301 + $0x90] sm:$0xff]
    %v321 = vld [vmem:[%s301 + $0x98] sm:$0xff]
    %v322 = vld [vmem:[%s301 + $0xa0] sm:$0xff]
    %v323 = vld [vmem:[%s301 + $0xa8] sm:$0xff]
    %v324 = vld [vmem:[%s301 + $0xb0] sm:$0xff]
    %v325 = vld [vmem:[%s301 + $0xb8] sm:$0xff]
    %v326 = vld [vmem:[%s301 + $0xc0] sm:$0xff]
    %v327 = vld [vmem:[%s301 + $0xc8] sm:$0xff]
    %v328 = vld [vmem:[%s301 + $0xd0] sm:$0xff]
    %v329 = vld [vmem:[%s301 + $0xd8] sm:$0xff]
    %v330 = vld [vmem:[%s301 + $0xe0] sm:$0xff]
    %v331 = vld [vmem:[%s301 + $0xe8] sm:$0xff]
    %v332 = vld [vmem:[%s301 + $0xf0] sm:$0xff]
    %v333 = vld [vmem:[%s301 + $0xf8] sm:$0xff]
    %v334 = vld [vmem:[%s301 + $0x100] sm:$0xff]
    %v335 = vld [vmem:[%s301 + $0x108] sm:$0xff]
    %v336 = vld [vmem:[%s301 + $0x110] sm:$0xff]
    %v337 = vld [vmem:[%s301 + $0x118] sm:$0xff]
    %v338 = vld [vmem:[%s301 + $0x120] sm:$0xff]
    %v339 = vld [vmem:[%s301 + $0x128] sm:$0xff]
    %v340 = vld [vmem:[%s301 + $0x130] sm:$0xff]
    %v341 = vld [vmem:[%s301 + $0x138] sm:$0xff]
    %v342 = vld [vmem:[%s301 + $0x140] sm:$0xff]
    %v343 = vld [vmem:[%s301 + $0x148] sm:$0xff]
    %v344 = vld [vmem:[%s301 + $0x150] sm:$0xff]
    %v345 = vld [vmem:[%s301 + $0x158] sm:$0xff]
    %v346 = vld [vmem:[%s301 + $0x160] sm:$0xff]
    %v347 = vld [vmem:[%s301 + $0x168] sm:$0xff]
    %v348 = vld [vmem:[%s301 + $0x170] sm:$0xff]
    %v349 = vld [vmem:[%s301 + $0x178] sm:$0xff]
    %v350 = vld [vmem:[%s301 + $0x180] sm:$0xff]
    %v351 = vld [vmem:[%s301 + $0x188] sm:$0xff]
    %v352 = vld [vmem:[%s301 + $0x190] sm:$0xff]
    %v353 = vld [vmem:[%s301 + $0x198] sm:$0xff]
    %v354 = vld [vmem:[%s301 + $0x1a0] sm:$0xff]
    %v355 = vld [vmem:[%s301 + $0x1a8] sm:$0xff]
    %v356 = vld [vmem:[%s301 + $0x1b0] sm:$0xff]
    %v357 = vld [vmem:[%s301 + $0x1b8] sm:$0xff]
    %v358 = vld [vmem:[%s301 + $0x1c0] sm:$0xff]
    %v359 = vld [vmem:[%s301 + $0x1c8] sm:$0xff]
    %v360 = vld [vmem:[%s301 + $0x1d0] sm:$0xff]
    %v361 = vld [vmem:[%s301 + $0x1d8] sm:$0xff]
    %v362 = vld [vmem:[%s301 + $0x1e0] sm:$0xff]
    %v363 = vld [vmem:[%s301 + $0x1e8] sm:$0xff]
    %v364 = vld [vmem:[%s301 + $0x1f0] sm:$0xff]
    %v365 = vld [vmem:[%s301 + $0x1f8] sm:$0xff]
    %s366 = scalar_lea.vmem %s5, 2
    %v367 = vld [vmem:[%s366] sm:$0x3]
    %v369 = vlaneseq
    %v370 = vshrl.u32 %v369, 7
    %v371 = vsub.s32 0, %v370
    %v372 = vrot.slane %v367, %v371
    %v373 = vlaneseq
    %v374 = vshrl.u32 %v373, 7
    %v375 = vsub.s32 1, %v374
    %v376 = vrot.slane %v367, %v375
    %379 = vmatprep.subr.mxu0 %v303
    %380 = vmatpush1.msra.mxu0 %v302
    %381 = vmatprep.subr.mxu0 %v305
    %382 = vmatpush1.msra.mxu0 %v304
    %383 = vmatprep.subr.mxu0 %v307
    %384 = vmatpush1.msra.mxu0 %v306
    %385 = vmatprep.subr.mxu0 %v309
    %386 = vmatpush1.msra.mxu0 %v308
    %387 = vmatprep.subr.mxu0 %v311
    %388 = vmatpush1.msra.mxu0 %v310
    %389 = vmatprep.subr.mxu0 %v313
    %390 = vmatpush1.msra.mxu0 %v312
    %391 = vmatprep.subr.mxu0 %v315
    %392 = vmatpush1.msra.mxu0 %v314
    %393 = vmatprep.subr.mxu0 %v317
    %394 = vmatpush1.msra.mxu0 %v316
    %395 = vmatprep.subr.mxu0 %v319
    %396 = vmatpush1.msra.mxu0 %v318
    %397 = vmatprep.subr.mxu0 %v321
    %398 = vmatpush1.msra.mxu0 %v320
    %399 = vmatprep.subr.mxu0 %v323
    %400 = vmatpush1.msra.mxu0 %v322
    %401 = vmatprep.subr.mxu0 %v325
    %402 = vmatpush1.msra.mxu0 %v324
    %403 = vmatprep.subr.mxu0 %v327
    %404 = vmatpush1.msra.mxu0 %v326
    %405 = vmatprep.subr.mxu0 %v329
    %406 = vmatpush1.msra.mxu0 %v328
    %407 = vmatprep.subr.mxu0 %v331
    %408 = vmatpush1.msra.mxu0 %v330
    %409 = vmatprep.subr.mxu0 %v333
    %410 = vmatpush1.msra.mxu0 %v332
    %411 = vmatprep.subr.mxu0 %v335
    %412 = vmatpush1.msra.mxu0 %v334
    %413 = vmatprep.subr.mxu0 %v337
    %414 = vmatpush1.msra.mxu0 %v336
    %415 = vmatprep.subr.mxu0 %v339
    %416 = vmatpush1.msra.mxu0 %v338
    %417 = vmatprep.subr.mxu0 %v341
    %418 = vmatpush1.msra.mxu0 %v340
    %419 = vmatprep.subr.mxu0 %v343
    %420 = vmatpush1.msra.mxu0 %v342
    %421 = vmatprep.subr.mxu0 %v345
    %422 = vmatpush1.msra.mxu0 %v344
    %423 = vmatprep.subr.mxu0 %v347
    %424 = vmatpush1.msra.mxu0 %v346
    %425 = vmatprep.subr.mxu0 %v349
    %426 = vmatpush1.msra.mxu0 %v348
    %427 = vmatprep.subr.mxu0 %v351
    %428 = vmatpush1.msra.mxu0 %v350
    %429 = vmatprep.subr.mxu0 %v353
    %430 = vmatpush1.msra.mxu0 %v352
    %431 = vmatprep.subr.mxu0 %v355
    %432 = vmatpush1.msra.mxu0 %v354
    %433 = vmatprep.subr.mxu0 %v357
    %434 = vmatpush1.msra.mxu0 %v356
    %435 = vmatprep.subr.mxu0 %v359
    %436 = vmatpush1.msra.mxu0 %v358
    %437 = vmatprep.subr.mxu0 %v361
    %438 = vmatpush1.msra.mxu0 %v360
    %439 = vmatprep.subr.mxu0 %v363
    %440 = vmatpush1.msra.mxu0 %v362
    %441 = vmatprep.subr.mxu0 %v365
    %442 = vmatpush1.msra.mxu0 %v364
    %443 = vmatprep.mubr.f32.mxu0 %v300
    %444 = vmatmul.mubr.f32.gmra.mrb[0].mxu0 %v299
    %v445 = vpop.f32.mrb[0].mxu0
    %v446 = vadd.f32 %v372, %v445
    %v447 = vpop.f32.mrb[0].mxu0
    %v448 = vadd.f32 %v376, %v447
    %449 = vdwg.mxu0
    %v450 = vtanh.pop %v446
    %v451 = vtanh.pop %v448
    %v452 = vld [vmem:[%s6] sm:$0xff]
    %v453 = vld [vmem:[%s6 + $0x8] sm:$0xff]
    %v454 = vld [vmem:[%s6 + $0x10] sm:$0xff]
    %v455 = vld [vmem:[%s6 + $0x18] sm:$0xff]
    %v456 = vld [vmem:[%s6 + $0x20] sm:$0xff]
    %v457 = vld [vmem:[%s6 + $0x28] sm:$0xff]
    %v458 = vld [vmem:[%s6 + $0x30] sm:$0xff]
    %v459 = vld [vmem:[%s6 + $0x38] sm:$0xff]
    %v460 = vld [vmem:[%s6 + $0x40] sm:$0xff]
    %v461 = vld [vmem:[%s6 + $0x48] sm:$0xff]
    %v462 = vld [vmem:[%s6 + $0x50] sm:$0xff]
    %v463 = vld [vmem:[%s6 + $0x58] sm:$0xff]
    %v464 = vld [vmem:[%s6 + $0x60] sm:$0xff]
    %v465 = vld [vmem:[%s6 + $0x68] sm:$0xff]
    %v466 = vld [vmem:[%s6 + $0x70] sm:$0xff]
    %v467 = vld [vmem:[%s6 + $0x78] sm:$0xff]
    %v468 = vld [vmem:[%s6 + $0x80] sm:$0xff]
    %v469 = vld [vmem:[%s6 + $0x88] sm:$0xff]
    %v470 = vld [vmem:[%s6 + $0x90] sm:$0xff]
    %v471 = vld [vmem:[%s6 + $0x98] sm:$0xff]
    %v472 = vld [vmem:[%s6 + $0xa0] sm:$0xff]
    %v473 = vld [vmem:[%s6 + $0xa8] sm:$0xff]
    %v474 = vld [vmem:[%s6 + $0xb0] sm:$0xff]
    %v475 = vld [vmem:[%s6 + $0xb8] sm:$0xff]
    %v476 = vld [vmem:[%s6 + $0xc0] sm:$0xff]
    %v477 = vld [vmem:[%s6 + $0xc8] sm:$0xff]
    %v478 = vld [vmem:[%s6 + $0xd0] sm:$0xff]
    %v479 = vld [vmem:[%s6 + $0xd8] sm:$0xff]
    %v480 = vld [vmem:[%s6 + $0xe0] sm:$0xff]
    %v481 = vld [vmem:[%s6 + $0xe8] sm:$0xff]
    %v482 = vld [vmem:[%s6 + $0xf0] sm:$0xff]
    %v483 = vld [vmem:[%s6 + $0xf8] sm:$0xff]
    %v484 = vld [vmem:[%s7] sm:$0x1]
    %v486 = vlaneseq
    %v487 = vshrl.u32 %v486, 7
    %v488 = vsub.s32 0, %v487
    %v489 = vrot.slane %v484, %v488
    %491 = vmatprep.subr.mxu0 0.0
    %492 = vmatpush1.msra.mxu0 %v452
    %493 = vmatprep.subr.mxu0 0.0
    %494 = vmatpush1.msra.mxu0 %v453
    %495 = vmatprep.subr.mxu0 0.0
    %496 = vmatpush1.msra.mxu0 %v454
    %497 = vmatprep.subr.mxu0 0.0
    %498 = vmatpush1.msra.mxu0 %v455
    %499 = vmatprep.subr.mxu0 0.0
    %500 = vmatpush1.msra.mxu0 %v456
    %501 = vmatprep.subr.mxu0 0.0
    %502 = vmatpush1.msra.mxu0 %v457
    %503 = vmatprep.subr.mxu0 0.0
    %504 = vmatpush1.msra.mxu0 %v458
    %505 = vmatprep.subr.mxu0 0.0
    %506 = vmatpush1.msra.mxu0 %v459
    %507 = vmatprep.subr.mxu0 0.0
    %508 = vmatpush1.msra.mxu0 %v460
    %509 = vmatprep.subr.mxu0 0.0
    %510 = vmatpush1.msra.mxu0 %v461
    %511 = vmatprep.subr.mxu0 0.0
    %512 = vmatpush1.msra.mxu0 %v462
    %513 = vmatprep.subr.mxu0 0.0
    %514 = vmatpush1.msra.mxu0 %v463
    %515 = vmatprep.subr.mxu0 0.0
    %516 = vmatpush1.msra.mxu0 %v464
    %517 = vmatprep.subr.mxu0 0.0
    %518 = vmatpush1.msra.mxu0 %v465
    %519 = vmatprep.subr.mxu0 0.0
    %520 = vmatpush1.msra.mxu0 %v466
    %521 = vmatprep.subr.mxu0 0.0
    %522 = vmatpush1.msra.mxu0 %v467
    %523 = vmatprep.subr.mxu0 0.0
    %524 = vmatpush1.msra.mxu0 %v468
    %525 = vmatprep.subr.mxu0 0.0
    %526 = vmatpush1.msra.mxu0 %v469
    %527 = vmatprep.subr.mxu0 0.0
    %528 = vmatpush1.msra.mxu0 %v470
    %529 = vmatprep.subr.mxu0 0.0
    %530 = vmatpush1.msra.mxu0 %v471
    %531 = vmatprep.subr.mxu0 0.0
    %532 = vmatpush1.msra.mxu0 %v472
    %533 = vmatprep.subr.mxu0 0.0
    %534 = vmatpush1.msra.mxu0 %v473
    %535 = vmatprep.subr.mxu0 0.0
    %536 = vmatpush1.msra.mxu0 %v474
    %537 = vmatprep.subr.mxu0 0.0
    %538 = vmatpush1.msra.mxu0 %v475
    %539 = vmatprep.subr.mxu0 0.0
    %540 = vmatpush1.msra.mxu0 %v476
    %541 = vmatprep.subr.mxu0 0.0
    %542 = vmatpush1.msra.mxu0 %v477
    %543 = vmatprep.subr.mxu0 0.0
    %544 = vmatpush1.msra.mxu0 %v478
    %545 = vmatprep.subr.mxu0 0.0
    %546 = vmatpush1.msra.mxu0 %v479
    %547 = vmatprep.subr.mxu0 0.0
    %548 = vmatpush1.msra.mxu0 %v480
    %549 = vmatprep.subr.mxu0 0.0
    %550 = vmatpush1.msra.mxu0 %v481
    %551 = vmatprep.subr.mxu0 0.0
    %552 = vmatpush1.msra.mxu0 %v482
    %553 = vmatprep.subr.mxu0 0.0
    %554 = vmatpush1.msra.mxu0 %v483
    %555 = vmatprep.mubr.f32.mxu0 %v451
    %556 = vmatmul.mubr.f32.gmra.mrb[0].mxu0 %v450
    %v557 = vpop.f32.mrb[0].mxu0
    %v558 = vadd.f32 %v489, %v557
    %v559 = vpop.f32.mrb[0].mxu0
    %560 = vdwg.mxu0
    %vm561 = vcmask 64512
    %562 = vst.msk [vmem:[#allocation5] sm:$0xff] %vm561, %v558
    // Predicated region
    $region38: #{tpu_custom_call.1} parent=1 // pred_check
      _
    $region39: #{tpu_custom_call.1} parent=1 // pred_check_branch
      %564 = sbr.rel (0) target = $region41
    $region40: #{tpu_custom_call.1} parent=1 // pred_region
      %s566 = ssub.s32 128, 128
      %567 = vsyncadd [#allocation4], %s566
      %s569 = sshll.u32 [#allocation5], 4
      %s570 = int_to_ptr.vmem [resolvable:$true] %s569
      %572 = dma.vmem_to_hbm [thread:$0]  %s570, 128, %s8, [#allocation4]
    $region41: #{tpu_custom_call.1} parent=1 // pred_fallthru
      _
    // Predicated region
    $region42: #{tpu_custom_call.1} parent=1 // pred_check
      _
    $region43: #{tpu_custom_call.1} parent=1 // pred_check_branch
      %574 = sbr.rel (0) target = $region45
    $region44: #{tpu_custom_call.1} parent=1 // pred_region
      %575 = dma.done [#allocation4], 128
    $region45: #{tpu_custom_call.1} parent=1 // pred_fallthru
      _
    %576 = vsyncpa [#allocation3], 1
    %577 = vsyncpa [#allocation4], 1

</llo_original>
